<compile_context>
chip_gen: v6e
topology: v6e:2x2x1
jax: 0.10.0
libtpu: 0.0.40
codegen_flags: <defaults>
</compile_context>

<pallas_src>
import jax
import jax.numpy as jnp
from jax.experimental import pallas as pl
from jax.experimental.pallas import tpu as pltpu

KERNEL_SIZE = 1  # nn.MaxPool1d(kernel_size=1, stride=1)
STRIDE = 1


def maxpool_kernel(x_ref, o_ref):
    """x_ref: (TB, 1, W) tile of the pre-sliced x[:, 0, :1, :]; o_ref: (TB, W).

    MaxPool1d(kernel_size=1, stride=1) along the last axis is the identity and
    the [:, 0, :] selection is over the (already length-1) middle axis, so the
    fused op is a dtype-preserving copy of row 0 — no f32 round-trip, no
    reshape, straight vld -> vst.
    """
    o_ref[...] = x_ref[:, 0, :]
    # TODO(synk): implement a true windowed max here if KERNEL_SIZE/STRIDE ever
    # become > 1; this module only ever uses kernel_size=1, stride=1.


def _round_up(n, m):
    return ((n + m - 1) // m) * m


def max_pool_forward(x, *, use_pallas=True):
    """x: [B, C, H, W] -> [B, W] (same dtype). Equals x[:, 0, 0, :] for k=1, s=1."""
    B, C, H, W = x.shape
    assert KERNEL_SIZE == 1 and STRIDE == 1, "module only uses kernel_size=1, stride=1"
    n_out = (W - KERNEL_SIZE) // STRIDE + 1  # == W

    if not use_pallas:
        # Review item 1: the whole forward is an identity slice; XLA reads
        # exactly B*W*itemsize bytes. Fastest path on v5e/v6e/v7x.
        return x[:, 0, 0, :]

    # Review item 2: let XLA do the strided channel/row gather (reads only the
    # needed B*W elements); the Pallas kernel then streams a contiguous
    # (B, 1, W) slab with zero over-fetch and no sublane constraint on H.
    x_sl = x[:, 0, :1, :]  # (B, 1, W)

    itemsize = jnp.dtype(x.dtype).itemsize
    # Dtype-aware packed-sublane multiple: f32 -> 8, bf16 -> 16, int8/fp8 -> 32.
    sub = 8 * max(1, 4 // itemsize)

    if B <= sub:
        TB = B  # block dim == full batch dim: always a legal block shape
    else:
        # ~2 MiB per block => 2*in + 2*out double-buffered blocks ~ 8 MiB,
        # comfortably under even v5e's 16 MiB default scoped-VMEM limit.
        budget = 2 * 1024 * 1024
        tb_budget = max(sub, (budget // (W * itemsize)) // sub * sub)
        TB = min(tb_budget, _round_up(B, sub))
        if B >= 2 * sub:
            # >= 2 grid steps so both v7x TensorCores get a "parallel" block.
            TB = min(TB, _round_up(pl.cdiv(B, 2), sub))

    grid = (pl.cdiv(B, TB),)
    return pl.pallas_call(
        maxpool_kernel,
        out_shape=jax.ShapeDtypeStruct((B, n_out), x.dtype),
        grid=grid,
        in_specs=[pl.BlockSpec((TB, 1, W), lambda i: (i, 0, 0))],
        out_specs=pl.BlockSpec((TB, n_out), lambda i: (i, 0)),
        compiler_params=pltpu.CompilerParams(dimension_semantics=("parallel",)),
    )(x_sl)


if __name__ == "__main__":
    key = jax.random.PRNGKey(0)
    B, C, H, W = 2, 4, 16, 16
    x = jax.random.normal(key, (B, C, H, W), dtype=jnp.float32)

    out = max_pool_forward(x)  # Pallas path (use_pallas=False is the pure-XLA fast path)
    jax.block_until_ready(out)

    # Pure-JAX reference of the PyTorch forward:
    # reshape(B, C*H, W) -> MaxPool1d(k=1, s=1) (identity) -> [:, 0, :]
    ref = x.reshape(B, C * H, W)[:, 0, :]
    assert out.shape == (B, W), out.shape
    assert out.dtype == x.dtype
    assert jnp.array_equal(out, ref), "mismatch vs reference"

    print("KERNEL_OK")
</pallas_src>

<mosaic_0001>
module attributes {stable_mosaic.version = 11 : i64} {
  func.func @maxpool_kernel(%arg0: i32, %arg1: memref<2x1x16xf32, #tpu.memory_space<vmem>>, %arg2: memref<2x16xf32, #tpu.memory_space<vmem>>) attributes {dimension_semantics = [#tpu.dimension_semantics<parallel>], iteration_bounds = array<i64: 1>, scalar_prefetch = 0 : i64, scratch_operands = 0 : i64, tpu.core_type = #tpu.core_type<tc>, window_params = [{transform_indices = @transform_0, window_bounds = array<i64: 2, 1, 16>}, {transform_indices = @transform_1, window_bounds = array<i64: 2, 16>}]} {
    %c0 = arith.constant 0 : index
    %c0_0 = arith.constant 0 : index
    %c0_1 = arith.constant 0 : index
    %0 = vector.load %arg1[%c0, %c0_0, %c0_1] : memref<2x1x16xf32, #tpu.memory_space<vmem>>, vector<2x1x16xf32>
    %1 = vector.shape_cast %0 : vector<2x1x16xf32> to vector<2x16xf32>
    %c0_2 = arith.constant 0 : index
    %c0_3 = arith.constant 0 : index
    %2 = vector.load %arg2[%c0_2, %c0_3] : memref<2x16xf32, #tpu.memory_space<vmem>>, vector<2x16xf32>
    tpu.vector_store %arg2[%c0_2, %c0_3], %1 {strides = array<i32>} : memref<2x16xf32, #tpu.memory_space<vmem>>, vector<2x16xf32>,
    return
  }
  func.func @transform_0(%arg0: i32) -> (i32, i32, i32) {
    %c0_i32 = arith.constant 0 : i32
    %c0_i32_0 = arith.constant 0 : i32
    %c0_i32_1 = arith.constant 0 : i32
    return %arg0, %c0_i32, %c0_i32_0 : i32, i32, i32
  }
  func.func @transform_1(%arg0: i32) -> (i32, i32) {
    %c0_i32 = arith.constant 0 : i32
    %c0_i32_0 = arith.constant 0 : i32
    return %arg0, %c0_i32 : i32, i32
  }
}

</mosaic_0001>

<llo_original>
// kernel: tpu_custom_call.1
$region0: #{tpu_custom_call.1}
  #allocation0 [shape = 'u32[]', space=smem, size = 0x4, offset = 0x4, fixed_abs, tag = 'smem constant byte address 0x4 - core index']
  #allocation1 [shape = 'u32[144,128]{1,0:T(1,128)}', space=vmem, size = 0x12000, scoped, tag = 'internal scratch']
  %s0 = inlined_call_operand.hbm [shape: f32[2,1,16], index: 0, kind: input, shape index: {}]
  %s1 = inlined_call_operand.hbm [shape: f32[2,16], index: 1, kind: output, shape index: {}]
  %s2 = sld [smem:[#allocation0]]
  $region18: #{tpu_custom_call.1} parent=0
    _
  %s4 = ssub.s32 1, %s2
  %s5 = scalar_select 0, %s4, %s2
  $region1: #{tpu_custom_call.1} parent=0
    #allocation2 [shape = 'u8[1024]{0}', space=vmem, size = 0x400, scoped, tag = 'input window, operand 0, single buffered']
    #allocation3 [shape = 's32[1]{0}', space=sflag, size = 0x4, scoped, tag = 'scoped memory for tpu_custom_call.1']
    #allocation4 [shape = 's32[1]{0}', space=sflag, size = 0x4, scoped, tag = 'scoped memory for tpu_custom_call.1']
    #allocation5 [shape = 'u8[1024]{0}', space=vmem, size = 0x400, scoped, tag = 'output window, operand 0, single buffered']
    %6 = vsyncpa [#allocation3], 0
    %7 = vsyncpa [#allocation4], 0
    // Predicated region
    $region2: #{tpu_custom_call.1} parent=1 // pred_check
      _
    $region3: #{tpu_custom_call.1} parent=1 // pred_check_branch
      %9 = sbr.rel (0) target = $region5
    $region4: #{tpu_custom_call.1} parent=1 // pred_region
      %s11 = ssub.s32 32, 32
      %12 = vsyncadd [#allocation3], %s11
      %s13 = sshll.u32 [#allocation2], 4
      %s14 = int_to_ptr.vmem [resolvable:$true] %s13
      %19 = dma.hbm_to_vmem [thread:$0]  %s0, 32, %s14, [#allocation3], 16, 16, 1
    $region5: #{tpu_custom_call.1} parent=1 // pred_fallthru
      _
    // Predicated region
    $region6: #{tpu_custom_call.1} parent=1 // pred_check
      _
    $region7: #{tpu_custom_call.1} parent=1 // pred_check_branch
      %21 = sbr.rel (0) target = $region9
    $region8: #{tpu_custom_call.1} parent=1 // pred_region
      %22 = dma.done [#allocation3], 32
    $region9: #{tpu_custom_call.1} parent=1 // pred_fallthru
      _
    %v23 = vld [vmem:[#allocation2] sm:$0x1]
    %v24 = vld [vmem:[#allocation2 + $0x1] sm:$0x1]
    %v27 = vcombine.low %v23, %v24
    %v29 = vunpack.c.l.s4 1966171168
    %v30 = vunpack.c.0.s8 %v29
    %v31 = vlaneseq
    %v32 = vshrl.u32 %v31, 7
    %v33 = vsub.s32 %v30, %v32
    %v34 = vrot.slane %v27, %v33
    %v36 = vunpack.c.l.s4 1966171168
    %v37 = vunpack.c.0.s8 %v36
    %v38 = vlaneseq
    %v39 = vshrl.u32 %v38, 7
    %v40 = vsub.s32 %v37, %v39
    %v41 = vrot.slane %v34, %v40
    %vm43 = vcmask 123904
    %44 = vst.msk [vmem:[#allocation5] sm:$0x3] %vm43, %v41
    // Predicated region
    $region10: #{tpu_custom_call.1} parent=1 // pred_check
      _
    $region11: #{tpu_custom_call.1} parent=1 // pred_check_branch
      %46 = sbr.rel (0) target = $region13
    $region12: #{tpu_custom_call.1} parent=1 // pred_region
      %s48 = ssub.s32 32, 32
      %49 = vsyncadd [#allocation4], %s48
      %s51 = sshll.u32 [#allocation5], 4
      %s52 = int_to_ptr.vmem [resolvable:$true] %s51
      %54 = dma.vmem_to_hbm [thread:$0]  %s52, 32, %s1, [#allocation4]
    $region13: #{tpu_custom_call.1} parent=1 // pred_fallthru
      _
    // Predicated region
    $region14: #{tpu_custom_call.1} parent=1 // pred_check
      _
    $region15: #{tpu_custom_call.1} parent=1 // pred_check_branch
      %56 = sbr.rel (0) target = $region17
    $region16: #{tpu_custom_call.1} parent=1 // pred_region
      %57 = dma.done [#allocation4], 32
    $region17: #{tpu_custom_call.1} parent=1 // pred_fallthru
      _
    %58 = vsyncpa [#allocation3], 1
    %59 = vsyncpa [#allocation4], 1

</llo_original>
